<compile_context>
chip_gen: v7x
topology: tpu7x:2x2x1
jax: 0.10.0
libtpu: 0.0.40
codegen_flags: <defaults>
</compile_context>

<pallas_src>
import jax
import jax.numpy as jnp
from jax.experimental import pallas as pl
from jax.experimental.pallas import tpu as pltpu

IN_F = 13          # input features (Boston housing)
HID = 6            # hidden units
HID_PAD = 8        # tiny zero-pad of the hidden dim (exact: relu(0)=0 hits zero W2 cols)
TILE_N_MAX = 512   # batch tile >= 512 rows amortizes per-grid-step overhead


def ffn_kernel(x_ref, w1t_ref, b1_ref, w2_ref, b2_ref, o_ref):
    """One batch tile of the fused FFN.

    x_ref  : (tile_n, 13)   input rows (no lane padding in HBM)
    w1t_ref: (13, 8)        W1^T, cols 6..7 zero
    b1_ref : (1, 8)         b1,   cols 6..7 zero
    w2_ref : (1, 8)         W2 row, cols 6..7 zero
    b2_ref : (1, 1)         b2
    o_ref  : (tile_n, 1)    output rows (narrow output -> minimal HBM writeback)
    """
    h = jnp.dot(x_ref[...], w1t_ref[...], preferred_element_type=jnp.float32)
    h = jnp.maximum(h + b1_ref[...], 0.0)  # ReLU
    # 6->1 layer as a VPU multiply + lane reduction (cheaper than a second MXU pass).
    out = jnp.sum(h * w2_ref[...], axis=-1, keepdims=True) + b2_ref[...]
    o_ref[...] = out.astype(o_ref.dtype)


def prepare_params(w1, b1, w2, b2):
    """Pad/transpose params once, outside the per-call jit path."""
    f32 = jnp.float32
    w1t = jnp.zeros((IN_F, HID_PAD), f32).at[:, :HID].set(w1.astype(f32).T)
    b1r = jnp.zeros((1, HID_PAD), f32).at[0, :HID].set(b1.astype(f32))
    w2r = jnp.zeros((1, HID_PAD), f32).at[0, :HID].set(w2.astype(f32).reshape(-1))
    b2s = b2.astype(f32).reshape(1, 1)
    return w1t, b1r, w2r, b2s


@jax.jit
def boston_ffn(x, w1t, b1r, w2r, b2s):
    """x: (N, 13) -> (N, 1). Params must come from prepare_params()."""
    n = x.shape[0]
    tile_n = min(TILE_N_MAX, ((n + 7) // 8) * 8)   # sublane-aligned batch tile
    num_tiles = (n + tile_n - 1) // tile_n
    npad = num_tiles * tile_n

    x_p = x.astype(jnp.float32)
    if npad != n:
        x_p = jnp.pad(x_p, ((0, npad - n), (0, 0)))

    out = pl.pallas_call(
        ffn_kernel,
        out_shape=jax.ShapeDtypeStruct((npad, 1), jnp.float32),
        grid=(num_tiles,),
        in_specs=[
            pl.BlockSpec((tile_n, IN_F), lambda i: (i, 0)),    # x: batch-tiled, full 13-col rows
            pl.BlockSpec((IN_F, HID_PAD), lambda i: (0, 0)),   # W1^T (small, resident)
            pl.BlockSpec((1, HID_PAD), lambda i: (0, 0)),      # b1
            pl.BlockSpec((1, HID_PAD), lambda i: (0, 0)),      # W2 row
            pl.BlockSpec((1, 1), lambda i: (0, 0)),            # b2
        ],
        out_specs=pl.BlockSpec((tile_n, 1), lambda i: (i, 0)),
        compiler_params=pltpu.CompilerParams(
            # Batch tiles are independent: shard across both v7x TensorCores
            # (no-op on single-TC v5e/v6e), and enable double-buffered DMA.
            dimension_semantics=("parallel",),
        ),
    )(x_p, w1t, b1r, w2r, b2s)

    return out[:n]


def init_params(key):
    """Deterministic init mirroring nn.Linear default (uniform +/- 1/sqrt(fan_in))."""
    k1, k2, k3, k4 = jax.random.split(key, 4)
    bound1 = 1.0 / jnp.sqrt(13.0)
    bound2 = 1.0 / jnp.sqrt(6.0)
    w1 = jax.random.uniform(k1, (6, 13), jnp.float32, -bound1, bound1)
    b1 = jax.random.uniform(k2, (6,), jnp.float32, -bound1, bound1)
    w2 = jax.random.uniform(k3, (1, 6), jnp.float32, -bound2, bound2)
    b2 = jax.random.uniform(k4, (1,), jnp.float32, -bound2, bound2)
    return w1, b1, w2, b2


if __name__ == "__main__":
    key = jax.random.PRNGKey(0)
    k_x, k_x2, k_p = jax.random.split(key, 3)

    w1, b1, w2, b2 = init_params(k_p)
    # Pad/transpose the weights exactly once (hoisted out of the per-call path).
    w1t, b1r, w2r, b2s = prepare_params(w1, b1, w2, b2)

    def ref_fn(x):
        h = jnp.maximum(x @ w1.T + b1, 0.0)
        return h @ w2.T + b2

    # Case 1: batch of 8 samples, 13 features each.
    x = jax.random.normal(k_x, (8, 13), jnp.float32)
    out = jax.block_until_ready(boston_ffn(x, w1t, b1r, w2r, b2s))
    assert out.shape == (8, 1), out.shape
    assert jnp.allclose(out, ref_fn(x), atol=1e-5, rtol=1e-5)

    # Case 2: non-multiple-of-8 batch exercises the padding/slice path.
    x2 = jax.random.normal(k_x2, (13, 13), jnp.float32)
    out2 = jax.block_until_ready(boston_ffn(x2, w1t, b1r, w2r, b2s))
    assert out2.shape == (13, 1), out2.shape
    assert jnp.allclose(out2, ref_fn(x2), atol=1e-5, rtol=1e-5)

    print("KERNEL_OK")
</pallas_src>

<mosaic_0001>
module attributes {stable_mosaic.version = 11 : i64} {
  func.func @ffn_kernel(%arg0: i32, %arg1: memref<8x13xf32, #tpu.memory_space<vmem>>, %arg2: memref<13x8xf32, #tpu.memory_space<vmem>>, %arg3: memref<1x8xf32, #tpu.memory_space<vmem>>, %arg4: memref<1x8xf32, #tpu.memory_space<vmem>>, %arg5: memref<1x1xf32, #tpu.memory_space<vmem>>, %arg6: memref<8x1xf32, #tpu.memory_space<vmem>>) attributes {dimension_semantics = [#tpu.dimension_semantics<parallel>], iteration_bounds = array<i64: 1>, scalar_prefetch = 0 : i64, scratch_operands = 0 : i64, tpu.core_type = #tpu.core_type<tc>, window_params = [{transform_indices = @transform_0, window_bounds = array<i64: 8, 13>}, {pipeline_mode = #tpu.pipeline_mode<synchronous>, transform_indices = @transform_1, window_bounds = array<i64: 13, 8>}, {pipeline_mode = #tpu.pipeline_mode<synchronous>, transform_indices = @transform_2, window_bounds = array<i64: 1, 8>}, {pipeline_mode = #tpu.pipeline_mode<synchronous>, transform_indices = @transform_3, window_bounds = array<i64: 1, 8>}, {pipeline_mode = #tpu.pipeline_mode<synchronous>, transform_indices = @transform_4, window_bounds = array<i64: 1, 1>}, {transform_indices = @transform_5, window_bounds = array<i64: 8, 1>}]} {
    %c0 = arith.constant 0 : index
    %c0_0 = arith.constant 0 : index
    %0 = vector.load %arg1[%c0, %c0_0] : memref<8x13xf32, #tpu.memory_space<vmem>>, vector<8x13xf32>
    %c0_1 = arith.constant 0 : index
    %c0_2 = arith.constant 0 : index
    %1 = vector.load %arg2[%c0_1, %c0_2] : memref<13x8xf32, #tpu.memory_space<vmem>>, vector<13x8xf32>
    %cst = arith.constant dense<0.000000e+00> : vector<8x8xf32>
    %2 = tpu.matmul %0, %1, %cst {dimension_numbers = #tpu.dot_dimension_numbers<[1], [0], [0], [1], [0, 0, 1, 1], [], []>} : vector<8x13xf32>, vector<13x8xf32>, vector<8x8xf32> -> vector<8x8xf32>
    %c0_3 = arith.constant 0 : index
    %c0_4 = arith.constant 0 : index
    %3 = vector.load %arg3[%c0_3, %c0_4] : memref<1x8xf32, #tpu.memory_space<vmem>>, vector<1x8xf32>
    %4 = vector.broadcast %3 : vector<1x8xf32> to vector<8x8xf32>
    %5 = arith.addf %2, %4 : vector<8x8xf32>
    %cst_5 = arith.constant 0.000000e+00 : f32
    %6 = vector.broadcast %cst_5 : f32 to vector<8x8xf32>
    %7 = arith.maximumf %5, %6 : vector<8x8xf32>
    %c0_6 = arith.constant 0 : index
    %c0_7 = arith.constant 0 : index
    %8 = vector.load %arg4[%c0_6, %c0_7] : memref<1x8xf32, #tpu.memory_space<vmem>>, vector<1x8xf32>
    %9 = vector.broadcast %8 : vector<1x8xf32> to vector<8x8xf32>
    %10 = arith.mulf %7, %9 : vector<8x8xf32>
    %cst_8 = arith.constant dense<0.000000e+00> : vector<8xf32>
    %11 = vector.multi_reduction <add>, %10, %cst_8 [1] : vector<8x8xf32> to vector<8xf32>
    %12 = vector.shape_cast %11 : vector<8xf32> to vector<8x1xf32>
    %c0_9 = arith.constant 0 : index
    %c0_10 = arith.constant 0 : index
    %13 = vector.load %arg5[%c0_9, %c0_10] : memref<1x1xf32, #tpu.memory_space<vmem>>, vector<1x1xf32>
    %14 = vector.broadcast %13 : vector<1x1xf32> to vector<8x1xf32>
    %15 = arith.addf %12, %14 : vector<8x1xf32>
    %c0_11 = arith.constant 0 : index
    %c0_12 = arith.constant 0 : index
    %16 = vector.load %arg6[%c0_11, %c0_12] : memref<8x1xf32, #tpu.memory_space<vmem>>, vector<8x1xf32>
    tpu.vector_store %arg6[%c0_11, %c0_12], %15 {strides = array<i32>} : memref<8x1xf32, #tpu.memory_space<vmem>>, vector<8x1xf32>,
    return
  }
  func.func @transform_0(%arg0: i32) -> (i32, i32) {
    %c0_i32 = arith.constant 0 : i32
    %c0_i32_0 = arith.constant 0 : i32
    return %arg0, %c0_i32 : i32, i32
  }
  func.func @transform_1(%arg0: i32) -> (i32, i32) {
    %c0_i32 = arith.constant 0 : i32
    %c0_i32_0 = arith.constant 0 : i32
    %c0_i32_1 = arith.constant 0 : i32
    return %c0_i32, %c0_i32_0 : i32, i32
  }
  func.func @transform_2(%arg0: i32) -> (i32, i32) {
    %c0_i32 = arith.constant 0 : i32
    %c0_i32_0 = arith.constant 0 : i32
    %c0_i32_1 = arith.constant 0 : i32
    return %c0_i32, %c0_i32_0 : i32, i32
  }
  func.func @transform_3(%arg0: i32) -> (i32, i32) {
    %c0_i32 = arith.constant 0 : i32
    %c0_i32_0 = arith.constant 0 : i32
    %c0_i32_1 = arith.constant 0 : i32
    return %c0_i32, %c0_i32_0 : i32, i32
  }
  func.func @transform_4(%arg0: i32) -> (i32, i32) {
    %c0_i32 = arith.constant 0 : i32
    %c0_i32_0 = arith.constant 0 : i32
    %c0_i32_1 = arith.constant 0 : i32
    return %c0_i32, %c0_i32_0 : i32, i32
  }
  func.func @transform_5(%arg0: i32) -> (i32, i32) {
    %c0_i32 = arith.constant 0 : i32
    %c0_i32_0 = arith.constant 0 : i32
    return %arg0, %c0_i32 : i32, i32
  }
}

</mosaic_0001>

<llo_original>
// kernel: boston_ffn.1
$region0: #{boston_ffn.1}
  #allocation0 [shape = 'u32[]', space=smem, size = 0x4, offset = 0x4, fixed_abs, tag = 'smem constant byte address 0x4 - core index']
  #allocation1 [shape = 'u32[144,128]{1,0:T(1,128)}', space=vmem, size = 0x12000, scoped, tag = 'internal scratch']
  #allocation2 [shape = 'f32[1,1]{1,0:T(1,128)S(1)}', space=vmem, size = 0x200, scoped, tag = 'scoped memory for boston_ffn.1']
  %s0 = inlined_call_operand.vmem [shape: f32[8,13], index: 0, kind: input, shape index: {}]
  %s1 = inlined_call_operand.vmem [shape: f32[13,8], index: 1, kind: input, shape index: {}]
  %s2 = inlined_call_operand.vmem [shape: f32[1,8], index: 2, kind: input, shape index: {}]
  %s3 = inlined_call_operand.vmem [shape: f32[1,8], index: 3, kind: input, shape index: {}]
  %s4 = inlined_call_operand.<no memory space> [shape: f32[1,1], index: 4, kind: input, shape index: {}]
  %s5 = inlined_call_operand.vmem [shape: f32[8,1], index: 5, kind: output, shape index: {}]
  %s6 = sld [smem:[#allocation0]]
  $region30: #{boston_ffn.1} parent=0
    _
  %s8 = ssub.s32 1, %s6
  %s9 = scalar_select 0, %s8, %s6
  %v10 = vstv %s4
  %11 = vst [vmem:[#allocation2] sm:$0x1] %v10
  // Predicated region
  $region2: #{boston_ffn.1} parent=0 // pred_check
    _
  $region3: #{boston_ffn.1} parent=0 // pred_check_branch
    %13 = sbr.rel (0) target = $region5
  $region4: #{boston_ffn.1} parent=0 // pred_region
    _
  $region5: #{boston_ffn.1} parent=0 // pred_fallthru
    _
  // Predicated region
  $region6: #{boston_ffn.1} parent=0 // pred_check
    _
  $region7: #{boston_ffn.1} parent=0 // pred_check_branch
    %15 = sbr.rel (0) target = $region9
  $region8: #{boston_ffn.1} parent=0 // pred_region
    _
  $region9: #{boston_ffn.1} parent=0 // pred_fallthru
    _
  // Predicated region
  $region10: #{boston_ffn.1} parent=0 // pred_check
    _
  $region11: #{boston_ffn.1} parent=0 // pred_check_branch
    %17 = sbr.rel (0) target = $region13
  $region12: #{boston_ffn.1} parent=0 // pred_region
    _
  $region13: #{boston_ffn.1} parent=0 // pred_fallthru
    _
  // Predicated region
  $region14: #{boston_ffn.1} parent=0 // pred_check
    _
  $region15: #{boston_ffn.1} parent=0 // pred_check_branch
    %19 = sbr.rel (0) target = $region17
  $region16: #{boston_ffn.1} parent=0 // pred_region
    _
  $region17: #{boston_ffn.1} parent=0 // pred_fallthru
    _
  // Predicated region
  $region18: #{boston_ffn.1} parent=0 // pred_check
    _
  $region19: #{boston_ffn.1} parent=0 // pred_check_branch
    %21 = sbr.rel (0) target = $region21
  $region20: #{boston_ffn.1} parent=0 // pred_region
    _
  $region21: #{boston_ffn.1} parent=0 // pred_fallthru
    _
  %v22 = vld [vmem:[%s0] sm:$0xff]
  %v23 = vld [vmem:[%s1] sm:$0xff]
  %v24 = vld [vmem:[%s1 + $0x8] sm:$0x1f]
  %v25 = vld [vmem:[%s2] sm:$0x1]
  %v27 = vlaneseq
  %v28 = vshrl.u32 %v27, 7
  %v29 = vsub.s32 0, %v28
  %v30 = vrot.slane %v25, %v29
  %vm32 = vcmask 105472
  %v34 = vsel %vm32, %v22, 0
  %vm36 = vcmask 1044480
  %v38 = vsel %vm36, %v24, 0
  %40 = vmatprep.subr.mxu0 0.0
  %41 = vmatpush1.msra.mxu0 %v23
  %42 = vmatprep.subr.mxu0 0.0
  %43 = vmatpush1.msra.mxu0 %v38
  %44 = vmatprep.subr.mxu0 0.0
  %45 = vmatpush1.msra.mxu0 0.0
  %46 = vmatprep.subr.mxu0 0.0
  %47 = vmatpush1.msra.mxu0 0.0
  %48 = vmatprep.subr.mxu0 0.0
  %49 = vmatpush1.msra.mxu0 0.0
  %50 = vmatprep.subr.mxu0 0.0
  %51 = vmatpush1.msra.mxu0 0.0
  %52 = vmatprep.subr.mxu0 0.0
  %53 = vmatpush1.msra.mxu0 0.0
  %54 = vmatprep.subr.mxu0 0.0
  %55 = vmatpush1.msra.mxu0 0.0
  %56 = vmatprep.subr.mxu0 0.0
  %57 = vmatpush1.msra.mxu0 0.0
  %58 = vmatprep.subr.mxu0 0.0
  %59 = vmatpush1.msra.mxu0 0.0
  %60 = vmatprep.subr.mxu0 0.0
  %61 = vmatpush1.msra.mxu0 0.0
  %62 = vmatprep.subr.mxu0 0.0
  %63 = vmatpush1.msra.mxu0 0.0
  %64 = vmatprep.subr.mxu0 0.0
  %65 = vmatpush1.msra.mxu0 0.0
  %66 = vmatprep.subr.mxu0 0.0
  %67 = vmatpush1.msra.mxu0 0.0
  %68 = vmatprep.subr.mxu0 0.0
  %69 = vmatpush1.msra.mxu0 0.0
  %70 = vmatprep.subr.mxu0 0.0
  %71 = vmatpush1.msra.mxu0 0.0
  %72 = vmatprep.subr.mxu0 0.0
  %73 = vmatpush1.msra.mxu0 0.0
  %74 = vmatprep.subr.mxu0 0.0
  %75 = vmatpush1.msra.mxu0 0.0
  %76 = vmatprep.subr.mxu0 0.0
  %77 = vmatpush1.msra.mxu0 0.0
  %78 = vmatprep.subr.mxu0 0.0
  %79 = vmatpush1.msra.mxu0 0.0
  %80 = vmatprep.subr.mxu0 0.0
  %81 = vmatpush1.msra.mxu0 0.0
  %82 = vmatprep.subr.mxu0 0.0
  %83 = vmatpush1.msra.mxu0 0.0
  %84 = vmatprep.subr.mxu0 0.0
  %85 = vmatpush1.msra.mxu0 0.0
  %86 = vmatprep.subr.mxu0 0.0
  %87 = vmatpush1.msra.mxu0 0.0
  %88 = vmatprep.subr.mxu0 0.0
  %89 = vmatpush1.msra.mxu0 0.0
  %90 = vmatprep.subr.mxu0 0.0
  %91 = vmatpush1.msra.mxu0 0.0
  %92 = vmatprep.subr.mxu0 0.0
  %93 = vmatpush1.msra.mxu0 0.0
  %94 = vmatprep.subr.mxu0 0.0
  %95 = vmatpush1.msra.mxu0 0.0
  %96 = vmatprep.subr.mxu0 0.0
  %97 = vmatpush1.msra.mxu0 0.0
  %98 = vmatprep.subr.mxu0 0.0
  %99 = vmatpush1.msra.mxu0 0.0
  %100 = vmatprep.subr.mxu0 0.0
  %101 = vmatpush1.msra.mxu0 0.0
  %102 = vmatprep.subr.mxu0 0.0
  %103 = vmatpush1.msra.mxu0 0.0
  %104 = vmatprep.mubr.f32.mxu0 0.0
  %105 = vmatmul.mubr.f32.gmra.mrb[0].mxu0 %v34
  %v106 = vpop.f32.mrb[0].mxu0
  %v107 = vadd.f32 %v30, %v106
  %v108 = vpop.f32.mrb[0].mxu0
  %109 = vdwg.mxu0
  %v110 = vmax.f32 %v107, 0.0
  %v111 = vld [vmem:[%s3] sm:$0x1]
  %v113 = vlaneseq
  %v114 = vshrl.u32 %v113, 7
  %v115 = vsub.s32 0, %v114
  %v116 = vrot.slane %v111, %v115
  %v118 = vmul.f32 %v110, %v116
  %vm119 = vcmask 64512
  %v120 = vsel %vm119, %v118, 0.0
  %121 = vadd.xlane.f32.xlu0 %v120
  %v122 = vpop.xlane.xlu0 %121
  %v123 = vld [vmem:[#allocation2] sm:$0x1]
  %v125 = vlaneseq
  %v126 = vshrl.u32 %v125, 7
  %v127 = vsub.s32 0, %v126
  %v128 = vrot.slane %v123, %v127
  %v130 = vadd.f32 %v122, %v128
  %vm131 = vcmask 7168
  %132 = vst.msk [vmem:[%s5] sm:$0xff] %vm131, %v130
  // Predicated region
  $region22: #{boston_ffn.1} parent=0 // pred_check
    _
  $region23: #{boston_ffn.1} parent=0 // pred_check_branch
    %134 = sbr.rel (0) target = $region25
  $region24: #{boston_ffn.1} parent=0 // pred_region
    _
  $region25: #{boston_ffn.1} parent=0 // pred_fallthru
    _
  // Predicated region
  $region26: #{boston_ffn.1} parent=0 // pred_check
    _
  $region27: #{boston_ffn.1} parent=0 // pred_check_branch
    %136 = sbr.rel (0) target = $region29
  $region28: #{boston_ffn.1} parent=0 // pred_region
    _
  $region29: #{boston_ffn.1} parent=0 // pred_fallthru
    _

</llo_original>
